<compile_context>
chip_gen: v6e
topology: v6e:2x2x1
jax: 0.10.0
libtpu: 0.0.40
codegen_flags: <defaults>
</compile_context>

<pallas_src>
import math

import jax
import jax.numpy as jnp
import numpy as np
from jax.experimental import pallas as pl
from jax.experimental.pallas import tpu as pltpu


# ----------------------------- hyper-parameters ------------------------------
N            = 256    # number of anchors (example)
W            = 32     # net_width
D            = 2      # defor_depth
FEAT_DIM     = 32     # deform_feat_dim
N_OFFSETS    = 4      # deform_n_offsets
TIMEBASE_PE  = 4      # timebase_pe -> times_ch = 2*4+1 = 9
POSBASE_PE   = 4      # posebase_pe
TIMENET_W    = 32
TIMENET_OUT  = 16
DYN_CH       = 2      # dynamics channels (col 0 = global, col -1 = local)

# packed-slab column layout (inputs, residuals and outputs share cols 0:53)
C_ANCHOR = 0                        # 3 cols
C_FEAT   = C_ANCHOR + 3             # 32 cols
C_OFF    = C_FEAT + FEAT_DIM        # 12 cols
C_SCAL   = C_OFF + 3 * N_OFFSETS    # 6 cols
C_RES    = C_SCAL + 6               # = 53 residual / output channels
C_TIME   = C_RES                    # col 53
C_DYN    = C_TIME + 1               # cols 54, 55
PACK_C   = 64                       # lane-dense padded width
C_ONE    = PACK_C - 1               # col 63: constant 1.0 (folds feature_out bias)
HEAD_K   = 4 * W                    # 128: concatenated head hidden width


# --------------------------------- kernel ------------------------------------
def _deform_kernel(x_ref, f0w_ref, f1w_ref, f1b_ref,
                   h0w_ref, h0b_ref, h1w_ref, h1b_ref, out_ref):
    x = x_ref[...]                                                   # [tm, 64]

    # feature_out MLP. f0 is zero-padded to 64-in with its bias folded into the
    # ones-column row, so layer 0 is a single matmul + relu.
    h = jnp.maximum(
        jnp.dot(x, f0w_ref[...], preferred_element_type=jnp.float32), 0.0)
    hidden = jnp.dot(h, f1w_ref[...], preferred_element_type=jnp.float32) + f1b_ref[...]

    # four deform heads fused: relu -> [tm,32]@[32,128] -> relu -> [tm,128]@[128,64]
    t = jnp.dot(jnp.maximum(hidden, 0.0), h0w_ref[...],
                preferred_element_type=jnp.float32) + h0b_ref[...]
    t = jnp.maximum(t, 0.0)
    d = jnp.dot(t, h1w_ref[...], preferred_element_type=jnp.float32) + h1b_ref[...]

    # dynamics gating: cols 0:3 use tanh(dyn[:,0]) (anchor), cols >=3 tanh(dyn[:,-1])
    dyn = jnp.tanh(x[:, C_DYN:C_DYN + DYN_CH])                       # [tm, 2] (one tanh)
    lane = jax.lax.broadcasted_iota(jnp.int32, (1, PACK_C), 1)
    gate = jnp.where(lane < 3, dyn[:, 0:1], dyn[:, DYN_CH - 1:DYN_CH])   # [tm, 64]

    # residual combine (mask == 1 statically -> removed). Head cols 53:64 are
    # exactly zero, so the time/dyn/pad/one columns pass through and get sliced
    # off in the wrapper.
    out_ref[...] = x + d * gate


# ------------------------------ param helpers ---------------------------------
def _linear_params(key, fan_in, fan_out):
    """PyTorch nn.Linear + xavier_uniform_(weight); default uniform bias.
    Returns (W_t [in,out], b [1,out])."""
    kw, kb = jax.random.split(key)
    xav = math.sqrt(6.0 / (fan_in + fan_out))
    w = jax.random.uniform(kw, (fan_out, fan_in), jnp.float32, -xav, xav)
    bb = 1.0 / math.sqrt(fan_in)
    b = jax.random.uniform(kb, (fan_out,), jnp.float32, -bb, bb)
    return w.T, b.reshape(1, fan_out)


def init_params(key):
    keys = jax.random.split(key, 12)
    times_ch = 2 * TIMEBASE_PE + 1
    p = {}
    p["t0"] = _linear_params(keys[0], times_ch, TIMENET_W)       # timenet
    p["t1"] = _linear_params(keys[1], TIMENET_W, TIMENET_OUT)
    p["f0"] = _linear_params(keys[2], 4, W)                      # feature_out (no_grid)
    p["f1"] = _linear_params(keys[3], W, W)
    p["p0"] = _linear_params(keys[4], W, W)                      # pos_deform
    p["p1"] = _linear_params(keys[5], W, 3)
    p["c0"] = _linear_params(keys[6], W, W)                      # feature_deform
    p["c1"] = _linear_params(keys[7], W, FEAT_DIM)
    p["o0"] = _linear_params(keys[8], W, W)                      # grid_offsets_deform
    p["o1"] = _linear_params(keys[9], W, 3 * N_OFFSETS)
    p["s0"] = _linear_params(keys[10], W, W)                     # grid_scaling_deform
    p["s1"] = _linear_params(keys[11], W, 6)
    return p


def pack_params(params):
    """Fuse per-layer weights into the lane-dense buffers the kernel consumes.
    Done once, outside jit. Numerically identical (extra weights are exact 0)."""
    f0w, f0b = params["f0"]                             # [4,W], [1,W]
    F0 = jnp.zeros((PACK_C, W), jnp.float32)
    F0 = F0.at[C_ANCHOR:C_ANCHOR + 3].set(f0w[0:3])     # anchor xyz rows
    F0 = F0.at[C_TIME].set(f0w[3])                      # time row
    F0 = F0.at[C_ONE].set(f0b[0])                       # bias folded into ones column
    F1, bF1 = params["f1"]

    # head layer-0: concat along output -> one [32,128] matmul
    W0 = jnp.concatenate([params[k][0] for k in ("p0", "c0", "o0", "s0")], axis=1)
    B0 = jnp.concatenate([params[k][1] for k in ("p0", "c0", "o0", "s0")], axis=1)

    # head layer-1: block-diagonal [128, 64] aligned with the residual columns
    W1 = jnp.zeros((HEAD_K, PACK_C), jnp.float32)
    B1 = jnp.zeros((1, PACK_C), jnp.float32)
    col = 0
    for hi, k in enumerate(("p1", "c1", "o1", "s1")):
        w, b = params[k]
        c = w.shape[1]
        W1 = W1.at[hi * W:(hi + 1) * W, col:col + c].set(w)
        B1 = B1.at[:, col:col + c].set(b)
        col += c
    assert col == C_RES

    return {"F0": F0, "F1": F1, "bF1": bF1,
            "W0": W0, "B0": B0, "W1": W1, "B1": B1,
            "t0": params["t0"], "t1": params["t1"]}


def poc_fre(x, poc_buf):
    emb = (x[..., None] * poc_buf).reshape(*x.shape[:-1], -1)
    return jnp.concatenate([x, jnp.sin(emb), jnp.cos(emb)], axis=-1)


def _round_up(x, m):
    return ((x + m - 1) // m) * m


def _choose_tm(n):
    # keep >=2 grid steps when possible (v7x: 2 TensorCores share the "parallel"
    # axis), tiles a multiple of 8 sublanes, capped at 1024 rows so the
    # double-buffered [tm,64] in/out tiles stay far below VMEM on all chips.
    if n <= 16:
        return 8
    return min(1024, _round_up(pl.cdiv(n, 2), 8))


# --------------------------------- wrapper ------------------------------------
@jax.jit
def deform_network_anchor_forward(packed, anchor, feat, grid_offsets, grid_scaling,
                                  dynamics, times_sel):
    n = anchor.shape[0]

    # --- glue mirroring the PyTorch forward. With no_grid=True these never feed
    #     the returned tensors (DCE'd under jit; kept for fidelity). ---
    pos_poc = 2.0 ** jnp.arange(POSBASE_PE, dtype=jnp.float32)
    time_poc = 2.0 ** jnp.arange(TIMEBASE_PE, dtype=jnp.float32)
    point_emb = poc_fre(anchor, pos_poc)                # point_emb[:, :3] == anchor
    time_emb = poc_fre(times_sel, time_poc)
    t0w, t0b = packed["t0"]
    t1w, t1b = packed["t1"]
    _times_feature = jnp.maximum(time_emb @ t0w + t0b, 0.0) @ t1w + t1b   # unused

    # --- pack everything into one lane-dense [n, 64] slab ---
    off_flat = grid_offsets.reshape(n, 3 * N_OFFSETS)
    n_zero_pad = PACK_C - (C_DYN + DYN_CH) - 1
    x_packed = jnp.concatenate(
        [anchor, feat, off_flat, grid_scaling, times_sel[:, :1], dynamics,
         jnp.zeros((n, n_zero_pad), jnp.float32),
         jnp.ones((n, 1), jnp.float32)],                            # bias column
        axis=-1)                                                     # [n, 64]

    tm = _choose_tm(n)
    n_pad = _round_up(n, tm)
    if n_pad != n:                                      # general N: zero row-pad
        x_packed = jnp.pad(x_packed, ((0, n_pad - n), (0, 0)))

    weights = [packed[k] for k in ("F0", "F1", "bF1", "W0", "B0", "W1", "B1")]

    out = pl.pallas_call(
        _deform_kernel,
        out_shape=jax.ShapeDtypeStruct((n_pad, PACK_C), jnp.float32),
        grid_spec=pltpu.PrefetchScalarGridSpec(
            num_scalar_prefetch=0,
            grid=(n_pad // tm,),
            in_specs=[pl.BlockSpec((tm, PACK_C), lambda i: (i, 0))]
                     + [pl.BlockSpec(w.shape, lambda i: (0, 0)) for w in weights],
            out_specs=pl.BlockSpec((tm, PACK_C), lambda i: (i, 0)),
        ),
        compiler_params=pltpu.CompilerParams(
            dimension_semantics=("parallel",),
            vmem_limit_bytes=16 * 1024 * 1024,   # tiny usage; safe on v5e/v6e/v7x
        ),
    )(x_packed, *weights)

    pts      = out[:n, C_ANCHOR:C_ANCHOR + 3]
    feat_def = out[:n, C_FEAT:C_FEAT + FEAT_DIM]
    off_def  = out[:n, C_OFF:C_OFF + 3 * N_OFFSETS].reshape(n, N_OFFSETS, 3)
    scal_def = out[:n, C_SCAL:C_SCAL + 6]
    return pts, feat_def, off_def, scal_def


# -------------------------- pure-JAX reference --------------------------------
def _ref_forward(params, anchor, feat, grid_offsets, grid_scaling, dynamics, times_sel):
    n = anchor.shape[0]

    def lin(name, x):
        w, b = params[name]
        return x @ w + b

    x_in = jnp.concatenate([anchor, times_sel[:, :1]], axis=-1)
    hidden = lin("f1", jnp.maximum(lin("f0", x_in), 0.0))

    def head(a, b_):
        t = jnp.maximum(hidden, 0.0)
        t = jnp.maximum(lin(a, t), 0.0)
        return lin(b_, t)

    mask = jnp.ones((n, 1), jnp.float32)
    dg = jnp.tanh(dynamics[:, 0:1])
    dl = jnp.tanh(dynamics[:, -1:])

    pts = anchor * mask + head("p0", "p1") * dg
    feat_def = feat * mask + head("c0", "c1") * dl
    off_flat = grid_offsets.reshape(n, -1)
    off_def = (off_flat * mask + head("o0", "o1") * dl).reshape(n, N_OFFSETS, 3)
    scal_def = grid_scaling * mask + head("s0", "s1") * dl
    return pts, feat_def, off_def, scal_def


# ----------------------------------- main --------------------------------------
if __name__ == "__main__":
    key = jax.random.PRNGKey(0)
    kp, ka, kf, ko, ks, kd, kt = jax.random.split(key, 7)

    params = init_params(kp)
    packed = pack_params(params)

    anchor       = jax.random.normal(ka, (N, 3), jnp.float32)
    feat         = jax.random.normal(kf, (N, FEAT_DIM), jnp.float32)
    grid_offsets = jax.random.normal(ko, (N, N_OFFSETS, 3), jnp.float32)
    grid_scaling = jax.random.normal(ks, (N, 6), jnp.float32)
    dynamics     = jax.random.normal(kd, (N, DYN_CH), jnp.float32)
    times_sel    = jax.random.uniform(kt, (N, 1), jnp.float32)

    outs = deform_network_anchor_forward(packed, anchor, feat, grid_offsets,
                                         grid_scaling, dynamics, times_sel)
    outs = jax.block_until_ready(outs)

    refs = _ref_forward(params, anchor, feat, grid_offsets, grid_scaling,
                        dynamics, times_sel)
    for got, want in zip(outs, refs):
        np.testing.assert_allclose(np.asarray(got), np.asarray(want),
                                   rtol=1e-4, atol=1e-4)

    print("KERNEL_OK")
</pallas_src>

<mosaic_0001>
module attributes {stable_mosaic.version = 11 : i64} {
  func.func @_deform_kernel(%arg0: i32, %arg1: memref<128x64xf32, #tpu.memory_space<vmem>>, %arg2: memref<64x32xf32, #tpu.memory_space<vmem>>, %arg3: memref<32x32xf32, #tpu.memory_space<vmem>>, %arg4: memref<1x32xf32, #tpu.memory_space<vmem>>, %arg5: memref<32x128xf32, #tpu.memory_space<vmem>>, %arg6: memref<1x128xf32, #tpu.memory_space<vmem>>, %arg7: memref<128x64xf32, #tpu.memory_space<vmem>>, %arg8: memref<1x64xf32, #tpu.memory_space<vmem>>, %arg9: memref<128x64xf32, #tpu.memory_space<vmem>>) attributes {dimension_semantics = [#tpu.dimension_semantics<parallel>], iteration_bounds = array<i64: 2>, scalar_prefetch = 0 : i64, scratch_operands = 0 : i64, tpu.core_type = #tpu.core_type<tc>, window_params = [{transform_indices = @transform_0, window_bounds = array<i64: 128, 64>}, {pipeline_mode = #tpu.pipeline_mode<synchronous>, transform_indices = @transform_1, window_bounds = array<i64: 64, 32>}, {pipeline_mode = #tpu.pipeline_mode<synchronous>, transform_indices = @transform_2, window_bounds = array<i64: 32, 32>}, {pipeline_mode = #tpu.pipeline_mode<synchronous>, transform_indices = @transform_3, window_bounds = array<i64: 1, 32>}, {pipeline_mode = #tpu.pipeline_mode<synchronous>, transform_indices = @transform_4, window_bounds = array<i64: 32, 128>}, {pipeline_mode = #tpu.pipeline_mode<synchronous>, transform_indices = @transform_5, window_bounds = array<i64: 1, 128>}, {pipeline_mode = #tpu.pipeline_mode<synchronous>, transform_indices = @transform_6, window_bounds = array<i64: 128, 64>}, {pipeline_mode = #tpu.pipeline_mode<synchronous>, transform_indices = @transform_7, window_bounds = array<i64: 1, 64>}, {transform_indices = @transform_8, window_bounds = array<i64: 128, 64>}]} {
    %c0 = arith.constant 0 : index
    %c0_0 = arith.constant 0 : index
    %0 = vector.load %arg1[%c0, %c0_0] : memref<128x64xf32, #tpu.memory_space<vmem>>, vector<128x64xf32>
    %c0_1 = arith.constant 0 : index
    %c0_2 = arith.constant 0 : index
    %1 = vector.load %arg2[%c0_1, %c0_2] : memref<64x32xf32, #tpu.memory_space<vmem>>, vector<64x32xf32>
    %cst = arith.constant dense<0.000000e+00> : vector<128x32xf32>
    %2 = tpu.matmul %0, %1, %cst {dimension_numbers = #tpu.dot_dimension_numbers<[1], [0], [0], [1], [0, 0, 1, 1], [], []>} : vector<128x64xf32>, vector<64x32xf32>, vector<128x32xf32> -> vector<128x32xf32>
    %cst_3 = arith.constant 0.000000e+00 : f32
    %3 = vector.broadcast %cst_3 : f32 to vector<128x32xf32>
    %4 = arith.maximumf %2, %3 : vector<128x32xf32>
    %c0_4 = arith.constant 0 : index
    %c0_5 = arith.constant 0 : index
    %5 = vector.load %arg3[%c0_4, %c0_5] : memref<32x32xf32, #tpu.memory_space<vmem>>, vector<32x32xf32>
    %cst_6 = arith.constant dense<0.000000e+00> : vector<128x32xf32>
    %6 = tpu.matmul %4, %5, %cst_6 {dimension_numbers = #tpu.dot_dimension_numbers<[1], [0], [0], [1], [0, 0, 1, 1], [], []>} : vector<128x32xf32>, vector<32x32xf32>, vector<128x32xf32> -> vector<128x32xf32>
    %c0_7 = arith.constant 0 : index
    %c0_8 = arith.constant 0 : index
    %7 = vector.load %arg4[%c0_7, %c0_8] : memref<1x32xf32, #tpu.memory_space<vmem>>, vector<1x32xf32>
    %8 = vector.broadcast %7 : vector<1x32xf32> to vector<128x32xf32>
    %9 = arith.addf %6, %8 : vector<128x32xf32>
    %cst_9 = arith.constant 0.000000e+00 : f32
    %10 = vector.broadcast %cst_9 : f32 to vector<128x32xf32>
    %11 = arith.maximumf %9, %10 : vector<128x32xf32>
    %c0_10 = arith.constant 0 : index
    %c0_11 = arith.constant 0 : index
    %12 = vector.load %arg5[%c0_10, %c0_11] : memref<32x128xf32, #tpu.memory_space<vmem>>, vector<32x128xf32>
    %cst_12 = arith.constant dense<0.000000e+00> : vector<128x128xf32>
    %13 = tpu.matmul %11, %12, %cst_12 {dimension_numbers = #tpu.dot_dimension_numbers<[1], [0], [0], [1], [0, 0, 1, 1], [], []>} : vector<128x32xf32>, vector<32x128xf32>, vector<128x128xf32> -> vector<128x128xf32>
    %c0_13 = arith.constant 0 : index
    %c0_14 = arith.constant 0 : index
    %14 = vector.load %arg6[%c0_13, %c0_14] : memref<1x128xf32, #tpu.memory_space<vmem>>, vector<1x128xf32>
    %15 = vector.broadcast %14 : vector<1x128xf32> to vector<128x128xf32>
    %16 = arith.addf %13, %15 : vector<128x128xf32>
    %cst_15 = arith.constant 0.000000e+00 : f32
    %17 = vector.broadcast %cst_15 : f32 to vector<128x128xf32>
    %18 = arith.maximumf %16, %17 : vector<128x128xf32>
    %c0_16 = arith.constant 0 : index
    %c0_17 = arith.constant 0 : index
    %19 = vector.load %arg7[%c0_16, %c0_17] : memref<128x64xf32, #tpu.memory_space<vmem>>, vector<128x64xf32>
    %cst_18 = arith.constant dense<0.000000e+00> : vector<128x64xf32>
    %20 = tpu.matmul %18, %19, %cst_18 {dimension_numbers = #tpu.dot_dimension_numbers<[1], [0], [0], [1], [0, 0, 1, 1], [], []>} : vector<128x128xf32>, vector<128x64xf32>, vector<128x64xf32> -> vector<128x64xf32>
    %c0_19 = arith.constant 0 : index
    %c0_20 = arith.constant 0 : index
    %21 = vector.load %arg8[%c0_19, %c0_20] : memref<1x64xf32, #tpu.memory_space<vmem>>, vector<1x64xf32>
    %22 = vector.broadcast %21 : vector<1x64xf32> to vector<128x64xf32>
    %23 = arith.addf %20, %22 : vector<128x64xf32>
    %24 = vector.extract_strided_slice %0 {offsets = [0, 54], sizes = [128, 2], strides = [1, 1]} : vector<128x64xf32> to vector<128x2xf32>
    %25 = math.tanh %24 : vector<128x2xf32>
    %26 = tpu.iota {dimensions = array<i32: 1>} : vector<1x64xi32>
    %c3_i32 = arith.constant 3 : i32
    %27 = vector.broadcast %c3_i32 : i32 to vector<1x64xi32>
    %28 = arith.cmpi slt, %26, %27 : vector<1x64xi32>
    %29 = vector.extract_strided_slice %25 {offsets = [0, 0], sizes = [128, 1], strides = [1, 1]} : vector<128x2xf32> to vector<128x1xf32>
    %30 = vector.extract_strided_slice %25 {offsets = [0, 1], sizes = [128, 1], strides = [1, 1]} : vector<128x2xf32> to vector<128x1xf32>
    %31 = vector.shape_cast %28 : vector<1x64xi1> to vector<1x64xi1>
    %32 = vector.broadcast %31 : vector<1x64xi1> to vector<128x64xi1>
    %33 = vector.shape_cast %29 : vector<128x1xf32> to vector<128x1xf32>
    %34 = vector.broadcast %33 : vector<128x1xf32> to vector<128x64xf32>
    %35 = vector.shape_cast %30 : vector<128x1xf32> to vector<128x1xf32>
    %36 = vector.broadcast %35 : vector<128x1xf32> to vector<128x64xf32>
    %37 = arith.select %32, %34, %36 : vector<128x64xi1>, vector<128x64xf32>
    %38 = arith.mulf %23, %37 : vector<128x64xf32>
    %39 = arith.addf %0, %38 : vector<128x64xf32>
    %c0_21 = arith.constant 0 : index
    %c0_22 = arith.constant 0 : index
    %40 = vector.load %arg9[%c0_21, %c0_22] : memref<128x64xf32, #tpu.memory_space<vmem>>, vector<128x64xf32>
    tpu.vector_store %arg9[%c0_21, %c0_22], %39 {strides = array<i32>} : memref<128x64xf32, #tpu.memory_space<vmem>>, vector<128x64xf32>,
    return
  }
  func.func @transform_0(%arg0: i32) -> (i32, i32) {
    %c0_i32 = arith.constant 0 : i32
    %c0_i32_0 = arith.constant 0 : i32
    return %arg0, %c0_i32 : i32, i32
  }
  func.func @transform_1(%arg0: i32) -> (i32, i32) {
    %c0_i32 = arith.constant 0 : i32
    %c0_i32_0 = arith.constant 0 : i32
    %c0_i32_1 = arith.constant 0 : i32
    return %c0_i32, %c0_i32_0 : i32, i32
  }
  func.func @transform_2(%arg0: i32) -> (i32, i32) {
    %c0_i32 = arith.constant 0 : i32
    %c0_i32_0 = arith.constant 0 : i32
    %c0_i32_1 = arith.constant 0 : i32
    return %c0_i32, %c0_i32_0 : i32, i32
  }
  func.func @transform_3(%arg0: i32) -> (i32, i32) {
    %c0_i32 = arith.constant 0 : i32
    %c0_i32_0 = arith.constant 0 : i32
    %c0_i32_1 = arith.constant 0 : i32
    return %c0_i32, %c0_i32_0 : i32, i32
  }
  func.func @transform_4(%arg0: i32) -> (i32, i32) {
    %c0_i32 = arith.constant 0 : i32
    %c0_i32_0 = arith.constant 0 : i32
    %c0_i32_1 = arith.constant 0 : i32
    return %c0_i32, %c0_i32_0 : i32, i32
  }
  func.func @transform_5(%arg0: i32) -> (i32, i32) {
    %c0_i32 = arith.constant 0 : i32
    %c0_i32_0 = arith.constant 0 : i32
    %c0_i32_1 = arith.constant 0 : i32
    return %c0_i32, %c0_i32_0 : i32, i32
  }
  func.func @transform_6(%arg0: i32) -> (i32, i32) {
    %c0_i32 = arith.constant 0 : i32
    %c0_i32_0 = arith.constant 0 : i32
    %c0_i32_1 = arith.constant 0 : i32
    return %c0_i32, %c0_i32_0 : i32, i32
  }
  func.func @transform_7(%arg0: i32) -> (i32, i32) {
    %c0_i32 = arith.constant 0 : i32
    %c0_i32_0 = arith.constant 0 : i32
    %c0_i32_1 = arith.constant 0 : i32
    return %c0_i32, %c0_i32_0 : i32, i32
  }
  func.func @transform_8(%arg0: i32) -> (i32, i32) {
    %c0_i32 = arith.constant 0 : i32
    %c0_i32_0 = arith.constant 0 : i32
    return %arg0, %c0_i32 : i32, i32
  }
}

</mosaic_0001>

<llo_original>
// kernel: deform_network_anchor_forward.1
$region0: #{deform_network_anchor_forward.1}
  #allocation0 [shape = 'u32[]', space=smem, size = 0x4, offset = 0x4, fixed_abs, tag = 'smem constant byte address 0x4 - core index']
  #allocation1 [shape = 'u32[144,128]{1,0:T(1,128)}', space=vmem, size = 0x12000, scoped, tag = 'internal scratch']
  %s0 = inlined_call_operand.vmem [shape: f32[256,64], index: 0, kind: input, shape index: {}]
  %s1 = inlined_call_operand.vmem [shape: f32[64,32], index: 1, kind: input, shape index: {}]
  %s2 = inlined_call_operand.vmem [shape: f32[32,32], index: 2, kind: input, shape index: {}]
  %s3 = inlined_call_operand.vmem [shape: f32[1,32], index: 3, kind: input, shape index: {}]
  %s4 = inlined_call_operand.vmem [shape: f32[32,128], index: 4, kind: input, shape index: {}]
  %s5 = inlined_call_operand.vmem [shape: f32[1,128], index: 5, kind: input, shape index: {}]
  %s6 = inlined_call_operand.vmem [shape: f32[128,64], index: 6, kind: input, shape index: {}]
  %s7 = inlined_call_operand.vmem [shape: f32[1,64], index: 7, kind: input, shape index: {}]
  %s8 = inlined_call_operand.vmem [shape: f32[256,64], index: 8, kind: output, shape index: {}]
  %s9 = sld [smem:[#allocation0]]
  $region65: #{deform_network_anchor_forward.1} parent=0
    _
  %s11 = ssub.s32 1, %s9
  %s12 = scalar_select 0, %s11, %s9
  loop: start=0, step=1, limit=4
  $region2: #{deform_network_anchor_forward.1} parent=0 // loop_pre_header
    _
  $region3: #{deform_network_anchor_forward.1} parent=0 // loop_header
    %s14 = sphi 0, %s18
    %p15 = scmp.ge.s32.totalorder %s14, 4
    %s24 = sphi 0, %s26
    %s27 = sphi 0, %s24
    %s28 = sphi 0, %s27
    %s44 = sphi 0, %s28
    %s48 = sphi 0, %s48
    %s50 = sphi 0, %s48
    %s51 = sphi 0, %s50
    %s65 = sphi 0, %s51
    %s69 = sphi 0, %s69
    %s71 = sphi 0, %s69
    %s72 = sphi 0, %s71
    %s86 = sphi 0, %s72
    %s90 = sphi 0, %s90
    %s92 = sphi 0, %s90
    %s93 = sphi 0, %s92
    %s107 = sphi 0, %s93
    %s111 = sphi 0, %s111
    %s113 = sphi 0, %s111
    %s114 = sphi 0, %s113
    %s128 = sphi 0, %s114
    %s132 = sphi 0, %s132
    %s134 = sphi 0, %s132
    %s135 = sphi 0, %s134
    %s149 = sphi 0, %s135
    %s153 = sphi 0, %s153
    %s155 = sphi 0, %s153
    %s156 = sphi 0, %s155
    %s170 = sphi 0, %s156
    %s174 = sphi 0, %s174
    %s176 = sphi 0, %s174
    %s177 = sphi 0, %s176
    %s191 = sphi 0, %s177
    %s197 = sphi 0, %s199
    %s200 = sphi 0, %s197
    %s201 = sphi 0, %s200
    %s217 = sphi 0, %s201
  $region4: #{deform_network_anchor_forward.1} parent=0 // loop_header_branch
    %17 = sbr.rel (%p15) target = $region8
  $region5: #{deform_network_anchor_forward.1} parent=0 // loop_body
    %s19 = ssub.s32 %s14, 1
    %s20 = ssub.s32 %s14, 2
    %s21 = sadd.s32 %s14, 1
    %s22 = ssub.s32 %s14, %s21
    %p23 = scmp.eq.s32.totalorder %s22, 0
    %s25 = sadd.s32 %s24, 1
    %s26 = scalar_select %p23, %s24, %s25
    %p29 = pneg %p23
    %p30 = scmp.eq.s32.totalorder %s14, 1
    %p31 = por %p29, %p30
    %p32 = scmp.ne.s32.totalorder %s24, %s27
    %p33 = scmp.eq.s32.totalorder %s14, 0
    %p34 = por %p32, %p33
    %p35 = scmp.ne.s32.totalorder %s24, %s27
    %p36 = scmp.eq.s32.totalorder %s19, 1
    %p37 = por %p35, %p36
    %p38 = scmp.ne.s32.totalorder %s27, %s28
    %p39 = scmp.eq.s32.totalorder %s19, 0
    %p40 = por %p38, %p39
    %p41 = scmp.ne.s32.totalorder %s27, %s28
    %p42 = scmp.eq.s32.totalorder %s20, 1
    %p43 = por %p41, %p42
    %p45 = scmp.ne.s32.totalorder %s28, %s44
    %p46 = scmp.eq.s32.totalorder %s20, 0
    %p47 = por %p45, %p46
    %s49 = sadd.s32 %s48, 1
    %p52 = scmp.eq.s32.totalorder %s14, 1
    %p53 = scmp.ne.s32.totalorder %s48, %s50
    %p54 = scmp.eq.s32.totalorder %s14, 0
    %p55 = por %p53, %p54
    %p56 = scmp.ne.s32.totalorder %s48, %s50
    %p57 = scmp.eq.s32.totalorder %s19, 1
    %p58 = por %p56, %p57
    %p59 = scmp.ne.s32.totalorder %s50, %s51
    %p60 = scmp.eq.s32.totalorder %s19, 0
    %p61 = por %p59, %p60
    %p62 = scmp.ne.s32.totalorder %s50, %s51
    %p63 = scmp.eq.s32.totalorder %s20, 1
    %p64 = por %p62, %p63
    %p66 = scmp.ne.s32.totalorder %s51, %s65
    %p67 = scmp.eq.s32.totalorder %s20, 0
    %p68 = por %p66, %p67
    %s70 = sadd.s32 %s69, 1
    %p73 = scmp.eq.s32.totalorder %s14, 1
    %p74 = scmp.ne.s32.totalorder %s69, %s71
    %p75 = scmp.eq.s32.totalorder %s14, 0
    %p76 = por %p74, %p75
    %p77 = scmp.ne.s32.totalorder %s69, %s71
    %p78 = scmp.eq.s32.totalorder %s19, 1
    %p79 = por %p77, %p78
    %p80 = scmp.ne.s32.totalorder %s71, %s72
    %p81 = scmp.eq.s32.totalorder %s19, 0
    %p82 = por %p80, %p81
    %p83 = scmp.ne.s32.totalorder %s71, %s72
    %p84 = scmp.eq.s32.totalorder %s20, 1
    %p85 = por %p83, %p84
    %p87 = scmp.ne.s32.totalorder %s72, %s86
    %p88 = scmp.eq.s32.totalorder %s20, 0
    %p89 = por %p87, %p88
    %s91 = sadd.s32 %s90, 1
    %p94 = scmp.eq.s32.totalorder %s14, 1
    %p95 = scmp.ne.s32.totalorder %s90, %s92
    %p96 = scmp.eq.s32.totalorder %s14, 0
    %p97 = por %p95, %p96
    %p98 = scmp.ne.s32.totalorder %s90, %s92
    %p99 = scmp.eq.s32.totalorder %s19, 1
    %p100 = por %p98, %p99
    %p101 = scmp.ne.s32.totalorder %s92, %s93
    %p102 = scmp.eq.s32.totalorder %s19, 0
    %p103 = por %p101, %p102
    %p104 = scmp.ne.s32.totalorder %s92, %s93
    %p105 = scmp.eq.s32.totalorder %s20, 1
    %p106 = por %p104, %p105
    %p108 = scmp.ne.s32.totalorder %s93, %s107
    %p109 = scmp.eq.s32.totalorder %s20, 0
    %p110 = por %p108, %p109
    %s112 = sadd.s32 %s111, 1
    %p115 = scmp.eq.s32.totalorder %s14, 1
    %p116 = scmp.ne.s32.totalorder %s111, %s113
    %p117 = scmp.eq.s32.totalorder %s14, 0
    %p118 = por %p116, %p117
    %p119 = scmp.ne.s32.totalorder %s111, %s113
    %p120 = scmp.eq.s32.totalorder %s19, 1
    %p121 = por %p119, %p120
    %p122 = scmp.ne.s32.totalorder %s113, %s114
    %p123 = scmp.eq.s32.totalorder %s19, 0
    %p124 = por %p122, %p123
    %p125 = scmp.ne.s32.totalorder %s113, %s114
    %p126 = scmp.eq.s32.totalorder %s20, 1
    %p127 = por %p125, %p126
    %p129 = scmp.ne.s32.totalorder %s114, %s128
    %p130 = scmp.eq.s32.totalorder %s20, 0
    %p131 = por %p129, %p130
    %s133 = sadd.s32 %s132, 1
    %p136 = scmp.eq.s32.totalorder %s14, 1
    %p137 = scmp.ne.s32.totalorder %s132, %s134
    %p138 = scmp.eq.s32.totalorder %s14, 0
    %p139 = por %p137, %p138
    %p140 = scmp.ne.s32.totalorder %s132, %s134
    %p141 = scmp.eq.s32.totalorder %s19, 1
    %p142 = por %p140, %p141
    %p143 = scmp.ne.s32.totalorder %s134, %s135
    %p144 = scmp.eq.s32.totalorder %s19, 0
    %p145 = por %p143, %p144
    %p146 = scmp.ne.s32.totalorder %s134, %s135
    %p147 = scmp.eq.s32.totalorder %s20, 1
    %p148 = por %p146, %p147
    %p150 = scmp.ne.s32.totalorder %s135, %s149
    %p151 = scmp.eq.s32.totalorder %s20, 0
    %p152 = por %p150, %p151
    %s154 = sadd.s32 %s153, 1
    %p157 = scmp.eq.s32.totalorder %s14, 1
    %p158 = scmp.ne.s32.totalorder %s153, %s155
    %p159 = scmp.eq.s32.totalorder %s14, 0
    %p160 = por %p158, %p159
    %p161 = scmp.ne.s32.totalorder %s153, %s155
    %p162 = scmp.eq.s32.totalorder %s19, 1
    %p163 = por %p161, %p162
    %p164 = scmp.ne.s32.totalorder %s155, %s156
    %p165 = scmp.eq.s32.totalorder %s19, 0
    %p166 = por %p164, %p165
    %p167 = scmp.ne.s32.totalorder %s155, %s156
    %p168 = scmp.eq.s32.totalorder %s20, 1
    %p169 = por %p167, %p168
    %p171 = scmp.ne.s32.totalorder %s156, %s170
    %p172 = scmp.eq.s32.totalorder %s20, 0
    %p173 = por %p171, %p172
    %s175 = sadd.s32 %s174, 1
    %p178 = scmp.eq.s32.totalorder %s14, 1
    %p179 = scmp.ne.s32.totalorder %s174, %s176
    %p180 = scmp.eq.s32.totalorder %s14, 0
    %p181 = por %p179, %p180
    %p182 = scmp.ne.s32.totalorder %s174, %s176
    %p183 = scmp.eq.s32.totalorder %s19, 1
    %p184 = por %p182, %p183
    %p185 = scmp.ne.s32.totalorder %s176, %s177
    %p186 = scmp.eq.s32.totalorder %s19, 0
    %p187 = por %p185, %p186
    %p188 = scmp.ne.s32.totalorder %s176, %s177
    %p189 = scmp.eq.s32.totalorder %s20, 1
    %p190 = por %p188, %p189
    %p192 = scmp.ne.s32.totalorder %s177, %s191
    %p193 = scmp.eq.s32.totalorder %s20, 0
    %p194 = por %p192, %p193
    %s195 = ssub.s32 %s14, %s21
    %p196 = scmp.eq.s32.totalorder %s195, 0
    %s198 = sadd.s32 %s197, 1
    %s199 = scalar_select %p196, %s197, %s198
    %p202 = pneg %p196
    %p203 = scmp.eq.s32.totalorder %s14, 1
    %p204 = por %p202, %p203
    %p205 = scmp.ne.s32.totalorder %s197, %s200
    %p206 = scmp.eq.s32.totalorder %s14, 0
    %p207 = por %p205, %p206
    %p208 = scmp.ne.s32.totalorder %s197, %s200
    %p209 = scmp.eq.s32.totalorder %s19, 1
    %p210 = por %p208, %p209
    %p211 = scmp.ne.s32.totalorder %s200, %s201
    %p212 = scmp.eq.s32.totalorder %s19, 0
    %p213 = por %p211, %p212
    %p214 = scmp.ne.s32.totalorder %s200, %s201
    %p215 = scmp.eq.s32.totalorder %s20, 1
    %p216 = por %p214, %p215
    %p218 = scmp.ne.s32.totalorder %s201, %s217
    %p219 = scmp.eq.s32.totalorder %s20, 0
    %p220 = por %p218, %p219
    %p221 = scmp.le.s32.totalorder 1, %s14
    %p222 = scmp.lt.s32.totalorder %s14, 3
    %p223 = pnand %p221, %p222
    %p224 = pneg %p223
    // Predicated region
    $region9: #{deform_network_anchor_forward.1} parent=5 // pred_check
      _
    $region10: #{deform_network_anchor_forward.1} parent=5 // pred_check_branch
      %226 = sbr.rel (%p223) target = $region12
    $region11: #{deform_network_anchor_forward.1} parent=5 // pred_region
      %s227 = ssub.s32 %s14, 1
      // Predicated region
      $region13: #{deform_network_anchor_forward.1} parent=11 // pred_check
        %p228 = pneg %p61
      $region14: #{deform_network_anchor_forward.1} parent=11 // pred_check_branch
        %230 = sbr.rel (%p228) target = $region16
      $region15: #{deform_network_anchor_forward.1} parent=11 // pred_region
        _
      $region16: #{deform_network_anchor_forward.1} parent=11 // pred_fallthru
        _
      // Predicated region
      $region17: #{deform_network_anchor_forward.1} parent=11 // pred_check
        %p231 = pneg %p82
      $region18: #{deform_network_anchor_forward.1} parent=11 // pred_check_branch
        %233 = sbr.rel (%p231) target = $region20
      $region19: #{deform_network_anchor_forward.1} parent=11 // pred_region
        _
      $region20: #{deform_network_anchor_forward.1} parent=11 // pred_fallthru
        _
      // Predicated region
      $region21: #{deform_network_anchor_forward.1} parent=11 // pred_check
        %p234 = pneg %p103
      $region22: #{deform_network_anchor_forward.1} parent=11 // pred_check_branch
        %236 = sbr.rel (%p234) target = $region24
      $region23: #{deform_network_anchor_forward.1} parent=11 // pred_region
        _
      $region24: #{deform_network_anchor_forward.1} parent=11 // pred_fallthru
        _
      // Predicated region
      $region25: #{deform_network_anchor_forward.1} parent=11 // pred_check
        %p237 = pneg %p124
      $region26: #{deform_network_anchor_forward.1} parent=11 // pred_check_branch
        %239 = sbr.rel (%p237) target = $region28
      $region27: #{deform_network_anchor_forward.1} parent=11 // pred_region
        _
      $region28: #{deform_network_anchor_forward.1} parent=11 // pred_fallthru
        _
      // Predicated region
      $region29: #{deform_network_anchor_forward.1} parent=11 // pred_check
        %p240 = pneg %p145
      $region30: #{deform_network_anchor_forward.1} parent=11 // pred_check_branch
        %242 = sbr.rel (%p240) target = $region32
      $region31: #{deform_network_anchor_forward.1} parent=11 // pred_region
        _
      $region32: #{deform_network_anchor_forward.1} parent=11 // pred_fallthru
        _
      // Predicated region
      $region33: #{deform_network_anchor_forward.1} parent=11 // pred_check
        %p243 = pneg %p166
      $region34: #{deform_network_anchor_forward.1} parent=11 // pred_check_branch
        %245 = sbr.rel (%p243) target = $region36
      $region35: #{deform_network_anchor_forward.1} parent=11 // pred_region
        _
      $region36: #{deform_network_anchor_forward.1} parent=11 // pred_fallthru
        _
      // Predicated region
      $region37: #{deform_network_anchor_forward.1} parent=11 // pred_check
        %p246 = pneg %p187
      $region38: #{deform_network_anchor_forward.1} parent=11 // pred_check_branch
        %248 = sbr.rel (%p246) target = $region40
      $region39: #{deform_network_anchor_forward.1} parent=11 // pred_region
        _
      $region40: #{deform_network_anchor_forward.1} parent=11 // pred_fallthru
        _
    $region12: #{deform_network_anchor_forward.1} parent=5 // pred_fallthru
      _
    %p249 = scmp.lt.s32.totalorder %s14, 2
    // Predicated region
    $region41: #{deform_network_anchor_forward.1} parent=5 // pred_check
      %p250 = pneg %p249
    $region42: #{deform_network_anchor_forward.1} parent=5 // pred_check_branch
      %252 = sbr.rel (%p250) target = $region44
    $region43: #{deform_network_anchor_forward.1} parent=5 // pred_region
      // Predicated region
      $region45: #{deform_network_anchor_forward.1} parent=43 // pred_check
        %p253 = pneg %p34
      $region46: #{deform_network_anchor_forward.1} parent=43 // pred_check_branch
        %255 = sbr.rel (%p253) target = $region48
      $region47: #{deform_network_anchor_forward.1} parent=43 // pred_region
        %s256 = smul.u32 16, %s14
        %p257 = scmp.lt.s32.totalorder %s256, 31
        %s258 = scalar_select %p257, %s256, 31
        %s259 = smul.addr %s258, 8
        %s260 = scalar_lea.vmem %s0, %s259
        %s261 = smul.u32 16, %s14
      $region48: #{deform_network_anchor_forward.1} parent=43 // pred_fallthru
        _
    $region44: #{deform_network_anchor_forward.1} parent=5 // pred_fallthru
      _
    %p262 = scmp.le.s32.totalorder 1, %s14
    %p263 = scmp.lt.s32.totalorder %s14, 3
    %p264 = pnand %p262, %p263
    %p265 = pneg %p264
    // Predicated region
    $region49: #{deform_network_anchor_forward.1} parent=5 // pred_check
      _
    $region50: #{deform_network_anchor_forward.1} parent=5 // pred_check_branch
      %267 = sbr.rel (%p264) target = $region52
    $region51: #{deform_network_anchor_forward.1} parent=5 // pred_region
      %s268 = ssub.s32 %s14, 1
      %s269 = smul.u32 16, %s19
      %p270 = scmp.lt.s32.totalorder %s269, 31
      %s271 = scalar_select %p270, %s269, 31
      %s272 = smul.addr %s271, 8
      %s273 = scalar_lea.vmem %s0, %s272
      %p274 = pneg %p40
      %p275 = pneg %p37
      %p276 = pneg %p61
      %p277 = pneg %p58
      %p278 = pneg %p82
      %p279 = pneg %p79
      %p280 = pneg %p103
      %p281 = pneg %p100
      %p282 = pneg %p124
      %p283 = pneg %p121
      %p284 = pneg %p145
      %p285 = pneg %p142
      %p286 = pneg %p166
      %p287 = pneg %p163
      %p288 = pneg %p187
      %p289 = pneg %p184
      %p290 = pneg %p213
      %p291 = pneg %p210
      %s292 = smul.u32 16, %s19
      %p293 = scmp.lt.s32.totalorder %s292, 31
      %s294 = scalar_select %p293, %s292, 31
      %s295 = smul.addr %s294, 8
      %s296 = scalar_lea.vmem %s8, %s295
      %s297 = smul.u32 16, %s19
      %p298 = scmp.lt.s32.totalorder %s297, 31
      %s299 = scalar_select %p298, %s297, 31
      %s300 = smul.addr %s299, 8
      %s301 = scalar_lea.vmem %s0, %s300
      %s302 = smul.u32 16, %s19
      %s303 = smul.u32 16, %s19
      %p304 = scmp.lt.s32.totalorder %s303, 31
      %s305 = scalar_select %p304, %s303, 31
      %s306 = smul.addr %s305, 8
      %s307 = scalar_lea.vmem %s8, %s306
      %s308 = smul.u32 16, %s19
      %v309 = vld [vmem:[%s301] sm:$0xff]
      %v310 = vld [vmem:[%s301 + $0x8] sm:$0xff]
      %v311 = vld [vmem:[%s301 + $0x10] sm:$0xff]
      %v312 = vld [vmem:[%s301 + $0x18] sm:$0xff]
      %v313 = vld [vmem:[%s301 + $0x20] sm:$0xff]
      %v314 = vld [vmem:[%s301 + $0x28] sm:$0xff]
      %v315 = vld [vmem:[%s301 + $0x30] sm:$0xff]
      %v316 = vld [vmem:[%s301 + $0x38] sm:$0xff]
      %v317 = vld [vmem:[%s301 + $0x40] sm:$0xff]
      %v318 = vld [vmem:[%s301 + $0x48] sm:$0xff]
      %v319 = vld [vmem:[%s301 + $0x50] sm:$0xff]
      %v320 = vld [vmem:[%s301 + $0x58] sm:$0xff]
      %v321 = vld [vmem:[%s301 + $0x60] sm:$0xff]
      %v322 = vld [vmem:[%s301 + $0x68] sm:$0xff]
      %v323 = vld [vmem:[%s301 + $0x70] sm:$0xff]
      %v324 = vld [vmem:[%s301 + $0x78] sm:$0xff]
      %v325 = vld [vmem:[%s1] sm:$0xff]
      %v326 = vld [vmem:[%s1 + $0x8] sm:$0xff]
      %v327 = vld [vmem:[%s1 + $0x10] sm:$0xff]
      %v328 = vld [vmem:[%s1 + $0x18] sm:$0xff]
      %v329 = vld [vmem:[%s1 + $0x20] sm:$0xff]
      %v330 = vld [vmem:[%s1 + $0x28] sm:$0xff]
      %v331 = vld [vmem:[%s1 + $0x30] sm:$0xff]
      %v332 = vld [vmem:[%s1 + $0x38] sm:$0xff]
      %vm333 = vcmask 523264
      %v335 = vsel %vm333, %v309, 0
      %v338 = vsel %vm333, %v310, 0
      %v341 = vsel %vm333, %v311, 0
      %v344 = vsel %vm333, %v312, 0
      %v347 = vsel %vm333, %v313, 0
      %v350 = vsel %vm333, %v314, 0
      %v353 = vsel %vm333, %v315, 0
      %v356 = vsel %vm333, %v316, 0
      %v359 = vsel %vm333, %v317, 0
      %v362 = vsel %vm333, %v318, 0
      %v365 = vsel %vm333, %v319, 0
      %v368 = vsel %vm333, %v320, 0
      %v371 = vsel %vm333, %v321, 0
      %v374 = vsel %vm333, %v322, 0
      %v377 = vsel %vm333, %v323, 0
      %v380 = vsel %vm333, %v324, 0
      %382 = vmatprep.subr.mxu0 0.0
      %383 = vmatpush1.msra.mxu0 0.0
      %384 = vmatprep.subr.mxu0 0.0
      %385 = vmatpush1.msra.mxu0 0.0
      %386 = vmatprep.subr.mxu0 0.0
      %387 = vmatpush1.msra.mxu0 0.0
      %388 = vmatprep.subr.mxu0 0.0
      %389 = vmatpush1.msra.mxu0 0.0
      %390 = vmatprep.subr.mxu0 0.0
      %391 = vmatpush1.msra.mxu0 0.0
      %392 = vmatprep.subr.mxu0 0.0
      %393 = vmatpush1.msra.mxu0 0.0
      %394 = vmatprep.subr.mxu0 0.0
      %395 = vmatpush1.msra.mxu0 0.0
      %396 = vmatprep.subr.mxu0 0.0
      %397 = vmatpush1.msra.mxu0 0.0
      %398 = vmatprep.subr.mxu0 0.0
      %399 = vmatpush1.msra.mxu0 %v332
      %400 = vmatprep.subr.mxu0 0.0
      %401 = vmatpush1.msra.mxu0 %v331
      %402 = vmatprep.subr.mxu0 0.0
      %403 = vmatpush1.msra.mxu0 %v330
      %404 = vmatprep.subr.mxu0 0.0
      %405 = vmatpush1.msra.mxu0 %v329
      %406 = vmatprep.subr.mxu0 0.0
      %407 = vmatpush1.msra.mxu0 %v328
      %408 = vmatprep.subr.mxu0 0.0
      %409 = vmatpush1.msra.mxu0 %v327
      %410 = vmatprep.subr.mxu0 0.0
      %411 = vmatpush1.msra.mxu0 %v326
      %412 = vmatprep.subr.mxu0 0.0
      %413 = vmatpush1.msra.mxu0 %v325
      %414 = vmatprep.subr.mxu0 0.0
      %415 = vmatpush2.msra.mxu0 0.0
      %416 = vmatprep.subr.mxu0 0.0
      %417 = vmatpush2.msra.mxu0 0.0
      %418 = vmatprep.subr.mxu0 0.0
      %419 = vmatpush2.msra.mxu0 0.0
      %420 = vmatprep.subr.mxu0 0.0
      %421 = vmatpush2.msra.mxu0 0.0
      %422 = vmatprep.subr.mxu0 0.0
      %423 = vmatpush2.msra.mxu0 0.0
      %424 = vmatprep.subr.mxu0 0.0
      %425 = vmatpush2.msra.mxu0 0.0
      %426 = vmatprep.subr.mxu0 0.0
      %427 = vmatpush2.msra.mxu0 0.0
      %428 = vmatprep.subr.mxu0 0.0
      %429 = vmatpush2.msra.mxu0 0.0
      %430 = vmatprep.subr.mxu0 0.0
      %431 = vmatpush2.msra.mxu0 0.0
      %432 = vmatprep.subr.mxu0 0.0
      %433 = vmatpush2.msra.mxu0 0.0
      %434 = vmatprep.subr.mxu0 0.0
      %435 = vmatpush2.msra.mxu0 0.0
      %436 = vmatprep.subr.mxu0 0.0
      %437 = vmatpush2.msra.mxu0 0.0
      %438 = vmatprep.subr.mxu0 0.0
      %439 = vmatpush2.msra.mxu0 0.0
      %440 = vmatprep.subr.mxu0 0.0
      %441 = vmatpush2.msra.mxu0 0.0
      %442 = vmatprep.subr.mxu0 0.0
      %443 = vmatpush2.msra.mxu0 0.0
      %444 = vmatprep.subr.mxu0 0.0
      %445 = vmatpush2.msra.mxu0 0.0
      %446 = vmatprep.mubr.f32.mxu0 0.0
      %447 = vmatmul.mubr.f32.gmra.mxu0 %v335
      %v448 = vpop.f32.mrf.mxu0
      %v449 = vadd.f32 0.0, %v448
      %v450 = vpop.f32.mrf.mxu0
      %451 = vmatprep.mubr.f32.mxu0 0.0
      %452 = vmatmul.mubr.f32.gmra.mxu0 %v338
      %v453 = vpop.f32.mrf.mxu0
      %v454 = vadd.f32 0.0, %v453
      %v455 = vpop.f32.mrf.mxu0
      %456 = vmatprep.mubr.f32.mxu0 0.0
      %457 = vmatmul.mubr.f32.gmra.mxu0 %v341
      %v458 = vpop.f32.mrf.mxu0
      %v459 = vadd.f32 0.0, %v458
      %v460 = vpop.f32.mrf.mxu0
      %461 = vmatprep.mubr.f32.mxu0 0.0
      %462 = vmatmul.mubr.f32.gmra.mxu0 %v344
      %v463 = vpop.f32.mrf.mxu0
      %v464 = vadd.f32 0.0, %v463
      %v465 = vpop.f32.mrf.mxu0
      %466 = vmatprep.mubr.f32.mxu0 0.0
      %467 = vmatmul.mubr.f32.gmra.mxu0 %v347
      %v468 = vpop.f32.mrf.mxu0
      %v469 = vadd.f32 0.0, %v468
      %v470 = vpop.f32.mrf.mxu0
      %471 = vmatprep.mubr.f32.mxu0 0.0
      %472 = vmatmul.mubr.f32.gmra.mxu0 %v350
      %v473 = vpop.f32.mrf.mxu0
      %v474 = vadd.f32 0.0, %v473
      %v475 = vpop.f32.mrf.mxu0
      %476 = vmatprep.mubr.f32.mxu0 0.0
      %477 = vmatmul.mubr.f32.gmra.mxu0 %v353
      %v478 = vpop.f32.mrf.mxu0
      %v479 = vadd.f32 0.0, %v478
      %v480 = vpop.f32.mrf.mxu0
      %481 = vmatprep.mubr.f32.mxu0 0.0
      %482 = vmatmul.mubr.f32.gmra.mxu0 %v356
      %v483 = vpop.f32.mrf.mxu0
      %v484 = vadd.f32 0.0, %v483
      %v485 = vpop.f32.mrf.mxu0
      %486 = vmatprep.mubr.f32.mxu0 0.0
      %487 = vmatmul.mubr.f32.gmra.mxu0 %v359
      %v488 = vpop.f32.mrf.mxu0
      %v489 = vadd.f32 0.0, %v488
      %v490 = vpop.f32.mrf.mxu0
      %491 = vmatprep.mubr.f32.mxu0 0.0
      %492 = vmatmul.mubr.f32.gmra.mxu0 %v362
      %v493 = vpop.f32.mrf.mxu0
      %v494 = vadd.f32 0.0, %v493
      %v495 = vpop.f32.mrf.mxu0
      %496 = vmatprep.mubr.f32.mxu0 0.0
      %497 = vmatmul.mubr.f32.gmra.mxu0 %v365
      %v498 = vpop.f32.mrf.mxu0
      %v499 = vadd.f32 0.0, %v498
      %v500 = vpop.f32.mrf.mxu0
      %501 = vmatprep.mubr.f32.mxu0 0.0
      %502 = vmatmul.mubr.f32.gmra.mxu0 %v368
      %v503 = vpop.f32.mrf.mxu0
      %v504 = vadd.f32 0.0, %v503
      %v505 = vpop.f32.mrf.mxu0
      %506 = vmatprep.mubr.f32.mxu0 0.0
      %507 = vmatmul.mubr.f32.gmra.mxu0 %v371
      %v508 = vpop.f32.mrf.mxu0
      %v509 = vadd.f32 0.0, %v508
      %v510 = vpop.f32.mrf.mxu0
      %511 = vmatprep.mubr.f32.mxu0 0.0
      %512 = vmatmul.mubr.f32.gmra.mxu0 %v374
      %v513 = vpop.f32.mrf.mxu0
      %v514 = vadd.f32 0.0, %v513
      %v515 = vpop.f32.mrf.mxu0
      %516 = vmatprep.mubr.f32.mxu0 0.0
      %517 = vmatmul.mubr.f32.gmra.mxu0 %v377
      %v518 = vpop.f32.mrf.mxu0
      %v519 = vadd.f32 0.0, %v518
      %v520 = vpop.f32.mrf.mxu0
      %521 = vmatprep.mubr.f32.mxu0 0.0
      %522 = vmatmul.mubr.f32.gmra.mxu0 %v380
      %v523 = vpop.f32.mrf.mxu0
      %v524 = vadd.f32 0.0, %v523
      %v525 = vpop.f32.mrf.mxu0
      %526 = vdwg.mxu0
      %v527 = vmax.f32 %v449, 0.0
      %v528 = vmax.f32 %v454, 0.0
      %v529 = vmax.f32 %v459, 0.0
      %v530 = vmax.f32 %v464, 0.0
      %v531 = vmax.f32 %v469, 0.0
      %v532 = vmax.f32 %v474, 0.0
      %v533 = vmax.f32 %v479, 0.0
      %v534 = vmax.f32 %v484, 0.0
      %v535 = vmax.f32 %v489, 0.0
      %v536 = vmax.f32 %v494, 0.0
      %v537 = vmax.f32 %v499, 0.0
      %v538 = vmax.f32 %v504, 0.0
      %v539 = vmax.f32 %v509, 0.0
      %v540 = vmax.f32 %v514, 0.0
      %v541 = vmax.f32 %v519, 0.0
      %v542 = vmax.f32 %v524, 0.0
      %v543 = vld [vmem:[%s2] sm:$0xff]
      %v544 = vld [vmem:[%s2 + $0x8] sm:$0xff]
      %v545 = vld [vmem:[%s2 + $0x10] sm:$0xff]
      %v546 = vld [vmem:[%s2 + $0x18] sm:$0xff]
      %v547 = vld [vmem:[%s3] sm:$0x1]
      %v549 = vlaneseq
      %v550 = vshrl.u32 %v549, 7
      %v551 = vsub.s32 0, %v550
      %v552 = vrot.slane %v547, %v551
      %vm554 = vcmask 261120
      %v556 = vsel %vm554, %v527, 0
      %v559 = vsel %vm554, %v528, 0
      %v562 = vsel %vm554, %v529, 0
      %v565 = vsel %vm554, %v530, 0
      %v568 = vsel %vm554, %v531, 0
      %v571 = vsel %vm554, %v532, 0
      %v574 = vsel %vm554, %v533, 0
      %v577 = vsel %vm554, %v534, 0
      %v580 = vsel %vm554, %v535, 0
      %v583 = vsel %vm554, %v536, 0
      %v586 = vsel %vm554, %v537, 0
      %v589 = vsel %vm554, %v538, 0
      %v592 = vsel %vm554, %v539, 0
      %v595 = vsel %vm554, %v540, 0
      %v598 = vsel %vm554, %v541, 0
      %v601 = vsel %vm554, %v542, 0
      %603 = vmatprep.subr.mxu0 0.0
      %604 = vmatpush1.msra.mxu0 0.0
      %605 = vmatprep.subr.mxu0 0.0
      %606 = vmatpush1.msra.mxu0 0.0
      %607 = vmatprep.subr.mxu0 0.0
      %608 = vmatpush1.msra.mxu0 0.0
      %609 = vmatprep.subr.mxu0 0.0
      %610 = vmatpush1.msra.mxu0 0.0
      %611 = vmatprep.subr.mxu0 0.0
      %612 = vmatpush1.msra.mxu0 0.0
      %613 = vmatprep.subr.mxu0 0.0
      %614 = vmatpush1.msra.mxu0 0.0
      %615 = vmatprep.subr.mxu0 0.0
      %616 = vmatpush1.msra.mxu0 0.0
      %617 = vmatprep.subr.mxu0 0.0
      %618 = vmatpush1.msra.mxu0 0.0
      %619 = vmatprep.subr.mxu0 0.0
      %620 = vmatpush1.msra.mxu0 0.0
      %621 = vmatprep.subr.mxu0 0.0
      %622 = vmatpush1.msra.mxu0 0.0
      %623 = vmatprep.subr.mxu0 0.0
      %624 = vmatpush1.msra.mxu0 0.0
      %625 = vmatprep.subr.mxu0 0.0
      %626 = vmatpush1.msra.mxu0 0.0
      %627 = vmatprep.subr.mxu0 0.0
      %628 = vmatpush1.msra.mxu0 %v546
      %629 = vmatprep.subr.mxu0 0.0
      %630 = vmatpush1.msra.mxu0 %v545
      %631 = vmatprep.subr.mxu0 0.0
      %632 = vmatpush1.msra.mxu0 %v544
      %633 = vmatprep.subr.mxu0 0.0
      %634 = vmatpush1.msra.mxu0 %v543
      %635 = vmatprep.subr.mxu0 0.0
      %636 = vmatpush2.msra.mxu0 0.0
      %637 = vmatprep.subr.mxu0 0.0
      %638 = vmatpush2.msra.mxu0 0.0
      %639 = vmatprep.subr.mxu0 0.0
      %640 = vmatpush2.msra.mxu0 0.0
      %641 = vmatprep.subr.mxu0 0.0
      %642 = vmatpush2.msra.mxu0 0.0
      %643 = vmatprep.subr.mxu0 0.0
      %644 = vmatpush2.msra.mxu0 0.0
      %645 = vmatprep.subr.mxu0 0.0
      %646 = vmatpush2.msra.mxu0 0.0
      %647 = vmatprep.subr.mxu0 0.0
      %648 = vmatpush2.msra.mxu0 0.0
      %649 = vmatprep.subr.mxu0 0.0
      %650 = vmatpush2.msra.mxu0 0.0
      %651 = vmatprep.subr.mxu0 0.0
      %652 = vmatpush2.msra.mxu0 0.0
      %653 = vmatprep.subr.mxu0 0.0
      %654 = vmatpush2.msra.mxu0 0.0
      %655 = vmatprep.subr.mxu0 0.0
      %656 = vmatpush2.msra.mxu0 0.0
      %657 = vmatprep.subr.mxu0 0.0
      %658 = vmatpush2.msra.mxu0 0.0
      %659 = vmatprep.subr.mxu0 0.0
      %660 = vmatpush2.msra.mxu0 0.0
      %661 = vmatprep.subr.mxu0 0.0
      %662 = vmatpush2.msra.mxu0 0.0
      %663 = vmatprep.subr.mxu0 0.0
      %664 = vmatpush2.msra.mxu0 0.0
      %665 = vmatprep.subr.mxu0 0.0
      %666 = vmatpush2.msra.mxu0 0.0
      %667 = vmatprep.mubr.f32.mxu0 0.0
      %668 = vmatmul.mubr.f32.gmra.mxu0 %v556
      %v669 = vpop.f32.mrf.mxu0
      %v670 = vadd.f32 %v552, %v669
      %v671 = vpop.f32.mrf.mxu0
      %672 = vmatprep.mubr.f32.mxu0 0.0
      %673 = vmatmul.mubr.f32.gmra.mxu0 %v559
      %v674 = vpop.f32.mrf.mxu0
      %v675 = vadd.f32 %v552, %v674
      %v676 = vpop.f32.mrf.mxu0
      %677 = vmatprep.mubr.f32.mxu0 0.0
      %678 = vmatmul.mubr.f32.gmra.mxu0 %v562
      %v679 = vpop.f32.mrf.mxu0
      %v680 = vadd.f32 %v552, %v679
      %v681 = vpop.f32.mrf.mxu0
      %682 = vmatprep.mubr.f32.mxu0 0.0
      %683 = vmatmul.mubr.f32.gmra.mxu0 %v565
      %v684 = vpop.f32.mrf.mxu0
      %v685 = vadd.f32 %v552, %v684
      %v686 = vpop.f32.mrf.mxu0
      %687 = vmatprep.mubr.f32.mxu0 0.0
      %688 = vmatmul.mubr.f32.gmra.mxu0 %v568
      %v689 = vpop.f32.mrf.mxu0
      %v690 = vadd.f32 %v552, %v689
      %v691 = vpop.f32.mrf.mxu0
      %692 = vmatprep.mubr.f32.mxu0 0.0
      %693 = vmatmul.mubr.f32.gmra.mxu0 %v571
      %v694 = vpop.f32.mrf.mxu0
      %v695 = vadd.f32 %v552, %v694
      %v696 = vpop.f32.mrf.mxu0
      %697 = vmatprep.mubr.f32.mxu0 0.0
      %698 = vmatmul.mubr.f32.gmra.mxu0 %v574
      %v699 = vpop.f32.mrf.mxu0
      %v700 = vadd.f32 %v552, %v699
      %v701 = vpop.f32.mrf.mxu0
      %702 = vmatprep.mubr.f32.mxu0 0.0
      %703 = vmatmul.mubr.f32.gmra.mxu0 %v577
      %v704 = vpop.f32.mrf.mxu0
      %v705 = vadd.f32 %v552, %v704
      %v706 = vpop.f32.mrf.mxu0
      %707 = vmatprep.mubr.f32.mxu0 0.0
      %708 = vmatmul.mubr.f32.gmra.mxu0 %v580
      %v709 = vpop.f32.mrf.mxu0
      %v710 = vadd.f32 %v552, %v709
      %v711 = vpop.f32.mrf.mxu0
      %712 = vmatprep.mubr.f32.mxu0 0.0
      %713 = vmatmul.mubr.f32.gmra.mxu0 %v583
      %v714 = vpop.f32.mrf.mxu0
      %v715 = vadd.f32 %v552, %v714
      %v716 = vpop.f32.mrf.mxu0
      %717 = vmatprep.mubr.f32.mxu0 0.0
      %718 = vmatmul.mubr.f32.gmra.mxu0 %v586
      %v719 = vpop.f32.mrf.mxu0
      %v720 = vadd.f32 %v552, %v719
      %v721 = vpop.f32.mrf.mxu0
      %722 = vmatprep.mubr.f32.mxu0 0.0
      %723 = vmatmul.mubr.f32.gmra.mxu0 %v589
      %v724 = vpop.f32.mrf.mxu0
      %v725 = vadd.f32 %v552, %v724
      %v726 = vpop.f32.mrf.mxu0
      %727 = vmatprep.mubr.f32.mxu0 0.0
      %728 = vmatmul.mubr.f32.gmra.mxu0 %v592
      %v729 = vpop.f32.mrf.mxu0
      %v730 = vadd.f32 %v552, %v729
      %v731 = vpop.f32.mrf.mxu0
      %732 = vmatprep.mubr.f32.mxu0 0.0
      %733 = vmatmul.mubr.f32.gmra.mxu0 %v595
      %v734 = vpop.f32.mrf.mxu0
      %v735 = vadd.f32 %v552, %v734
      %v736 = vpop.f32.mrf.mxu0
      %737 = vmatprep.mubr.f32.mxu0 0.0
      %738 = vmatmul.mubr.f32.gmra.mxu0 %v598
      %v739 = vpop.f32.mrf.mxu0
      %v740 = vadd.f32 %v552, %v739
      %v741 = vpop.f32.mrf.mxu0
      %742 = vmatprep.mubr.f32.mxu0 0.0
      %743 = vmatmul.mubr.f32.gmra.mxu0 %v601
      %v744 = vpop.f32.mrf.mxu0
      %v745 = vadd.f32 %v552, %v744
      %v746 = vpop.f32.mrf.mxu0
      %747 = vdwg.mxu0
      %v748 = vmax.f32 %v670, 0.0
      %v749 = vmax.f32 %v675, 0.0
      %v750 = vmax.f32 %v680, 0.0
      %v751 = vmax.f32 %v685, 0.0
      %v752 = vmax.f32 %v690, 0.0
      %v753 = vmax.f32 %v695, 0.0
      %v754 = vmax.f32 %v700, 0.0
      %v755 = vmax.f32 %v705, 0.0
      %v756 = vmax.f32 %v710, 0.0
      %v757 = vmax.f32 %v715, 0.0
      %v758 = vmax.f32 %v720, 0.0
      %v759 = vmax.f32 %v725, 0.0
      %v760 = vmax.f32 %v730, 0.0
      %v761 = vmax.f32 %v735, 0.0
      %v762 = vmax.f32 %v740, 0.0
      %v763 = vmax.f32 %v745, 0.0
      %v764 = vld [vmem:[%s4] sm:$0xff]
      %v765 = vld [vmem:[%s4 + $0x8] sm:$0xff]
      %v766 = vld [vmem:[%s4 + $0x10] sm:$0xff]
      %v767 = vld [vmem:[%s4 + $0x18] sm:$0xff]
      %v768 = vld [vmem:[%s5] sm:$0x1]
      %v770 = vlaneseq
      %v771 = vshrl.u32 %v770, 7
      %v772 = vsub.s32 0, %v771
      %v773 = vrot.slane %v768, %v772
      %v776 = vsel %vm554, %v748, 0
      %v779 = vsel %vm554, %v749, 0
      %v782 = vsel %vm554, %v750, 0
      %v785 = vsel %vm554, %v751, 0
      %v788 = vsel %vm554, %v752, 0
      %v791 = vsel %vm554, %v753, 0
      %v794 = vsel %vm554, %v754, 0
      %v797 = vsel %vm554, %v755, 0
      %v800 = vsel %vm554, %v756, 0
      %v803 = vsel %vm554, %v757, 0
      %v806 = vsel %vm554, %v758, 0
      %v809 = vsel %vm554, %v759, 0
      %v812 = vsel %vm554, %v760, 0
      %v815 = vsel %vm554, %v761, 0
      %v818 = vsel %vm554, %v762, 0
      %v821 = vsel %vm554, %v763, 0
      %823 = vmatprep.subr.mxu0 0.0
      %824 = vmatpush1.msra.mxu0 0.0
      %825 = vmatprep.subr.mxu0 0.0
      %826 = vmatpush1.msra.mxu0 0.0
      %827 = vmatprep.subr.mxu0 0.0
      %828 = vmatpush1.msra.mxu0 0.0
      %829 = vmatprep.subr.mxu0 0.0
      %830 = vmatpush1.msra.mxu0 0.0
      %831 = vmatprep.subr.mxu0 0.0
      %832 = vmatpush1.msra.mxu0 0.0
      %833 = vmatprep.subr.mxu0 0.0
      %834 = vmatpush1.msra.mxu0 0.0
      %835 = vmatprep.subr.mxu0 0.0
      %836 = vmatpush1.msra.mxu0 0.0
      %837 = vmatprep.subr.mxu0 0.0
      %838 = vmatpush1.msra.mxu0 0.0
      %839 = vmatprep.subr.mxu0 0.0
      %840 = vmatpush1.msra.mxu0 0.0
      %841 = vmatprep.subr.mxu0 0.0
      %842 = vmatpush1.msra.mxu0 0.0
      %843 = vmatprep.subr.mxu0 0.0
      %844 = vmatpush1.msra.mxu0 0.0
      %845 = vmatprep.subr.mxu0 0.0
      %846 = vmatpush1.msra.mxu0 0.0
      %847 = vmatprep.subr.mxu0 0.0
      %848 = vmatpush1.msra.mxu0 %v767
      %849 = vmatprep.subr.mxu0 0.0
      %850 = vmatpush1.msra.mxu0 %v766
      %851 = vmatprep.subr.mxu0 0.0
      %852 = vmatpush1.msra.mxu0 %v765
      %853 = vmatprep.subr.mxu0 0.0
      %854 = vmatpush1.msra.mxu0 %v764
      %855 = vmatprep.subr.mxu0 0.0
      %856 = vmatpush2.msra.mxu0 0.0
      %857 = vmatprep.subr.mxu0 0.0
      %858 = vmatpush2.msra.mxu0 0.0
      %859 = vmatprep.subr.mxu0 0.0
      %860 = vmatpush2.msra.mxu0 0.0
      %861 = vmatprep.subr.mxu0 0.0
      %862 = vmatpush2.msra.mxu0 0.0
      %863 = vmatprep.subr.mxu0 0.0
      %864 = vmatpush2.msra.mxu0 0.0
      %865 = vmatprep.subr.mxu0 0.0
      %866 = vmatpush2.msra.mxu0 0.0
      %867 = vmatprep.subr.mxu0 0.0
      %868 = vmatpush2.msra.mxu0 0.0
      %869 = vmatprep.subr.mxu0 0.0
      %870 = vmatpush2.msra.mxu0 0.0
      %871 = vmatprep.subr.mxu0 0.0
      %872 = vmatpush2.msra.mxu0 0.0
      %873 = vmatprep.subr.mxu0 0.0
      %874 = vmatpush2.msra.mxu0 0.0
      %875 = vmatprep.subr.mxu0 0.0
      %876 = vmatpush2.msra.mxu0 0.0
      %877 = vmatprep.subr.mxu0 0.0
      %878 = vmatpush2.msra.mxu0 0.0
      %879 = vmatprep.subr.mxu0 0.0
      %880 = vmatpush2.msra.mxu0 0.0
      %881 = vmatprep.subr.mxu0 0.0
      %882 = vmatpush2.msra.mxu0 0.0
      %883 = vmatprep.subr.mxu0 0.0
      %884 = vmatpush2.msra.mxu0 0.0
      %885 = vmatprep.subr.mxu0 0.0
      %886 = vmatpush2.msra.mxu0 0.0
      %887 = vmatprep.mubr.f32.mxu0 0.0
      %888 = vmatmul.mubr.f32.gmra.mxu0 %v776
      %v889 = vpop.f32.mrf.mxu0
      %v890 = vadd.f32 %v773, %v889
      %v891 = vpop.f32.mrf.mxu0
      %892 = vmatprep.mubr.f32.mxu0 0.0
      %893 = vmatmul.mubr.f32.gmra.mxu0 %v779
      %v894 = vpop.f32.mrf.mxu0
      %v895 = vadd.f32 %v773, %v894
      %v896 = vpop.f32.mrf.mxu0
      %897 = vmatprep.mubr.f32.mxu0 0.0
      %898 = vmatmul.mubr.f32.gmra.mxu0 %v782
      %v899 = vpop.f32.mrf.mxu0
      %v900 = vadd.f32 %v773, %v899
      %v901 = vpop.f32.mrf.mxu0
      %902 = vmatprep.mubr.f32.mxu0 0.0
      %903 = vmatmul.mubr.f32.gmra.mxu0 %v785
      %v904 = vpop.f32.mrf.mxu0
      %v905 = vadd.f32 %v773, %v904
      %v906 = vpop.f32.mrf.mxu0
      %907 = vmatprep.mubr.f32.mxu0 0.0
      %908 = vmatmul.mubr.f32.gmra.mxu0 %v788
      %v909 = vpop.f32.mrf.mxu0
      %v910 = vadd.f32 %v773, %v909
      %v911 = vpop.f32.mrf.mxu0
      %912 = vmatprep.mubr.f32.mxu0 0.0
      %913 = vmatmul.mubr.f32.gmra.mxu0 %v791
      %v914 = vpop.f32.mrf.mxu0
      %v915 = vadd.f32 %v773, %v914
      %v916 = vpop.f32.mrf.mxu0
      %917 = vmatprep.mubr.f32.mxu0 0.0
      %918 = vmatmul.mubr.f32.gmra.mxu0 %v794
      %v919 = vpop.f32.mrf.mxu0
      %v920 = vadd.f32 %v773, %v919
      %v921 = vpop.f32.mrf.mxu0
      %922 = vmatprep.mubr.f32.mxu0 0.0
      %923 = vmatmul.mubr.f32.gmra.mxu0 %v797
      %v924 = vpop.f32.mrf.mxu0
      %v925 = vadd.f32 %v773, %v924
      %v926 = vpop.f32.mrf.mxu0
      %927 = vmatprep.mubr.f32.mxu0 0.0
      %928 = vmatmul.mubr.f32.gmra.mxu0 %v800
      %v929 = vpop.f32.mrf.mxu0
      %v930 = vadd.f32 %v773, %v929
      %v931 = vpop.f32.mrf.mxu0
      %932 = vmatprep.mubr.f32.mxu0 0.0
      %933 = vmatmul.mubr.f32.gmra.mxu0 %v803
      %v934 = vpop.f32.mrf.mxu0
      %v935 = vadd.f32 %v773, %v934
      %v936 = vpop.f32.mrf.mxu0
      %937 = vmatprep.mubr.f32.mxu0 0.0
      %938 = vmatmul.mubr.f32.gmra.mxu0 %v806
      %v939 = vpop.f32.mrf.mxu0
      %v940 = vadd.f32 %v773, %v939
      %v941 = vpop.f32.mrf.mxu0
      %942 = vmatprep.mubr.f32.mxu0 0.0
      %943 = vmatmul.mubr.f32.gmra.mxu0 %v809
      %v944 = vpop.f32.mrf.mxu0
      %v945 = vadd.f32 %v773, %v944
      %v946 = vpop.f32.mrf.mxu0
      %947 = vmatprep.mubr.f32.mxu0 0.0
      %948 = vmatmul.mubr.f32.gmra.mxu0 %v812
      %v949 = vpop.f32.mrf.mxu0
      %v950 = vadd.f32 %v773, %v949
      %v951 = vpop.f32.mrf.mxu0
      %952 = vmatprep.mubr.f32.mxu0 0.0
      %953 = vmatmul.mubr.f32.gmra.mxu0 %v815
      %v954 = vpop.f32.mrf.mxu0
      %v955 = vadd.f32 %v773, %v954
      %v956 = vpop.f32.mrf.mxu0
      %957 = vmatprep.mubr.f32.mxu0 0.0
      %958 = vmatmul.mubr.f32.gmra.mxu0 %v818
      %v959 = vpop.f32.mrf.mxu0
      %v960 = vadd.f32 %v773, %v959
      %v961 = vpop.f32.mrf.mxu0
      %962 = vmatprep.mubr.f32.mxu0 0.0
      %963 = vmatmul.mubr.f32.gmra.mxu0 %v821
      %v964 = vpop.f32.mrf.mxu0
      %v965 = vadd.f32 %v773, %v964
      %v966 = vpop.f32.mrf.mxu0
      %967 = vdwg.mxu0
      %v968 = vmax.f32 %v890, 0.0
      %v969 = vmax.f32 %v895, 0.0
      %v970 = vmax.f32 %v900, 0.0
      %v971 = vmax.f32 %v905, 0.0
      %v972 = vmax.f32 %v910, 0.0
      %v973 = vmax.f32 %v915, 0.0
      %v974 = vmax.f32 %v920, 0.0
      %v975 = vmax.f32 %v925, 0.0
      %v976 = vmax.f32 %v930, 0.0
      %v977 = vmax.f32 %v935, 0.0
      %v978 = vmax.f32 %v940, 0.0
      %v979 = vmax.f32 %v945, 0.0
      %v980 = vmax.f32 %v950, 0.0
      %v981 = vmax.f32 %v955, 0.0
      %v982 = vmax.f32 %v960, 0.0
      %v983 = vmax.f32 %v965, 0.0
      %v984 = vld [vmem:[%s6] sm:$0xff]
      %v985 = vld [vmem:[%s6 + $0x8] sm:$0xff]
      %v986 = vld [vmem:[%s6 + $0x10] sm:$0xff]
      %v987 = vld [vmem:[%s6 + $0x18] sm:$0xff]
      %v988 = vld [vmem:[%s6 + $0x20] sm:$0xff]
      %v989 = vld [vmem:[%s6 + $0x28] sm:$0xff]
      %v990 = vld [vmem:[%s6 + $0x30] sm:$0xff]
      %v991 = vld [vmem:[%s6 + $0x38] sm:$0xff]
      %v992 = vld [vmem:[%s6 + $0x40] sm:$0xff]
      %v993 = vld [vmem:[%s6 + $0x48] sm:$0xff]
      %v994 = vld [vmem:[%s6 + $0x50] sm:$0xff]
      %v995 = vld [vmem:[%s6 + $0x58] sm:$0xff]
      %v996 = vld [vmem:[%s6 + $0x60] sm:$0xff]
      %v997 = vld [vmem:[%s6 + $0x68] sm:$0xff]
      %v998 = vld [vmem:[%s6 + $0x70] sm:$0xff]
      %v999 = vld [vmem:[%s6 + $0x78] sm:$0xff]
      %v1000 = vld [vmem:[%s7] sm:$0x1]
      %v1002 = vlaneseq
      %v1003 = vshrl.u32 %v1002, 7
      %v1004 = vsub.s32 0, %v1003
      %v1005 = vrot.slane %v1000, %v1004
      %1007 = vmatprep.subr.mxu0 0.0
      %1008 = vmatpush1.msra.mxu0 %v999
      %1009 = vmatprep.subr.mxu0 0.0
      %1010 = vmatpush1.msra.mxu0 %v998
      %1011 = vmatprep.subr.mxu0 0.0
      %1012 = vmatpush1.msra.mxu0 %v997
      %1013 = vmatprep.subr.mxu0 0.0
      %1014 = vmatpush1.msra.mxu0 %v996
      %1015 = vmatprep.subr.mxu0 0.0
      %1016 = vmatpush1.msra.mxu0 %v995
      %1017 = vmatprep.subr.mxu0 0.0
      %1018 = vmatpush1.msra.mxu0 %v994
      %1019 = vmatprep.subr.mxu0 0.0
      %1020 = vmatpush1.msra.mxu0 %v993
      %1021 = vmatprep.subr.mxu0 0.0
      %1022 = vmatpush1.msra.mxu0 %v992
      %1023 = vmatprep.subr.mxu0 0.0
      %1024 = vmatpush1.msra.mxu0 %v991
      %1025 = vmatprep.subr.mxu0 0.0
      %1026 = vmatpush1.msra.mxu0 %v990
      %1027 = vmatprep.subr.mxu0 0.0
      %1028 = vmatpush1.msra.mxu0 %v989
      %1029 = vmatprep.subr.mxu0 0.0
      %1030 = vmatpush1.msra.mxu0 %v988
      %1031 = vmatprep.subr.mxu0 0.0
      %1032 = vmatpush1.msra.mxu0 %v987
      %1033 = vmatprep.subr.mxu0 0.0
      %1034 = vmatpush1.msra.mxu0 %v986
      %1035 = vmatprep.subr.mxu0 0.0
      %1036 = vmatpush1.msra.mxu0 %v985
      %1037 = vmatprep.subr.mxu0 0.0
      %1038 = vmatpush1.msra.mxu0 %v984
      %1039 = vmatprep.subr.mxu0 0.0
      %1040 = vmatpush2.msra.mxu0 0.0
      %1041 = vmatprep.subr.mxu0 0.0
      %1042 = vmatpush2.msra.mxu0 0.0
      %1043 = vmatprep.subr.mxu0 0.0
      %1044 = vmatpush2.msra.mxu0 0.0
      %1045 = vmatprep.subr.mxu0 0.0
      %1046 = vmatpush2.msra.mxu0 0.0
      %1047 = vmatprep.subr.mxu0 0.0
      %1048 = vmatpush2.msra.mxu0 0.0
      %1049 = vmatprep.subr.mxu0 0.0
      %1050 = vmatpush2.msra.mxu0 0.0
      %1051 = vmatprep.subr.mxu0 0.0
      %1052 = vmatpush2.msra.mxu0 0.0
      %1053 = vmatprep.subr.mxu0 0.0
      %1054 = vmatpush2.msra.mxu0 0.0
      %1055 = vmatprep.subr.mxu0 0.0
      %1056 = vmatpush2.msra.mxu0 0.0
      %1057 = vmatprep.subr.mxu0 0.0
      %1058 = vmatpush2.msra.mxu0 0.0
      %1059 = vmatprep.subr.mxu0 0.0
      %1060 = vmatpush2.msra.mxu0 0.0
      %1061 = vmatprep.subr.mxu0 0.0
      %1062 = vmatpush2.msra.mxu0 0.0
      %1063 = vmatprep.subr.mxu0 0.0
      %1064 = vmatpush2.msra.mxu0 0.0
      %1065 = vmatprep.subr.mxu0 0.0
      %1066 = vmatpush2.msra.mxu0 0.0
      %1067 = vmatprep.subr.mxu0 0.0
      %1068 = vmatpush2.msra.mxu0 0.0
      %1069 = vmatprep.subr.mxu0 0.0
      %1070 = vmatpush2.msra.mxu0 0.0
      %1071 = vmatprep.mubr.f32.mxu0 0.0
      %1072 = vmatmul.mubr.f32.gmra.mxu0 %v968
      %v1073 = vpop.f32.mrf.mxu0
      %v1074 = vadd.f32 %v1005, %v1073
      %v1075 = vpop.f32.mrf.mxu0
      %1076 = vmatprep.mubr.f32.mxu0 0.0
      %1077 = vmatmul.mubr.f32.gmra.mxu0 %v969
      %v1078 = vpop.f32.mrf.mxu0
      %v1079 = vadd.f32 %v1005, %v1078
      %v1080 = vpop.f32.mrf.mxu0
      %1081 = vmatprep.mubr.f32.mxu0 0.0
      %1082 = vmatmul.mubr.f32.gmra.mxu0 %v970
      %v1083 = vpop.f32.mrf.mxu0
      %v1084 = vadd.f32 %v1005, %v1083
      %v1085 = vpop.f32.mrf.mxu0
      %1086 = vmatprep.mubr.f32.mxu0 0.0
      %1087 = vmatmul.mubr.f32.gmra.mxu0 %v971
      %v1088 = vpop.f32.mrf.mxu0
      %v1089 = vadd.f32 %v1005, %v1088
      %v1090 = vpop.f32.mrf.mxu0
      %1091 = vmatprep.mubr.f32.mxu0 0.0
      %1092 = vmatmul.mubr.f32.gmra.mxu0 %v972
      %v1093 = vpop.f32.mrf.mxu0
      %v1094 = vadd.f32 %v1005, %v1093
      %v1095 = vpop.f32.mrf.mxu0
      %1096 = vmatprep.mubr.f32.mxu0 0.0
      %1097 = vmatmul.mubr.f32.gmra.mxu0 %v973
      %v1098 = vpop.f32.mrf.mxu0
      %v1099 = vadd.f32 %v1005, %v1098
      %v1100 = vpop.f32.mrf.mxu0
      %1101 = vmatprep.mubr.f32.mxu0 0.0
      %1102 = vmatmul.mubr.f32.gmra.mxu0 %v974
      %v1103 = vpop.f32.mrf.mxu0
      %v1104 = vadd.f32 %v1005, %v1103
      %v1105 = vpop.f32.mrf.mxu0
      %1106 = vmatprep.mubr.f32.mxu0 0.0
      %1107 = vmatmul.mubr.f32.gmra.mxu0 %v975
      %v1108 = vpop.f32.mrf.mxu0
      %v1109 = vadd.f32 %v1005, %v1108
      %v1110 = vpop.f32.mrf.mxu0
      %1111 = vmatprep.mubr.f32.mxu0 0.0
      %1112 = vmatmul.mubr.f32.gmra.mxu0 %v976
      %v1113 = vpop.f32.mrf.mxu0
      %v1114 = vadd.f32 %v1005, %v1113
      %v1115 = vpop.f32.mrf.mxu0
      %1116 = vmatprep.mubr.f32.mxu0 0.0
      %1117 = vmatmul.mubr.f32.gmra.mxu0 %v977
      %v1118 = vpop.f32.mrf.mxu0
      %v1119 = vadd.f32 %v1005, %v1118
      %v1120 = vpop.f32.mrf.mxu0
      %1121 = vmatprep.mubr.f32.mxu0 0.0
      %1122 = vmatmul.mubr.f32.gmra.mxu0 %v978
      %v1123 = vpop.f32.mrf.mxu0
      %v1124 = vadd.f32 %v1005, %v1123
      %v1125 = vpop.f32.mrf.mxu0
      %1126 = vmatprep.mubr.f32.mxu0 0.0
      %1127 = vmatmul.mubr.f32.gmra.mxu0 %v979
      %v1128 = vpop.f32.mrf.mxu0
      %v1129 = vadd.f32 %v1005, %v1128
      %v1130 = vpop.f32.mrf.mxu0
      %1131 = vmatprep.mubr.f32.mxu0 0.0
      %1132 = vmatmul.mubr.f32.gmra.mxu0 %v980
      %v1133 = vpop.f32.mrf.mxu0
      %v1134 = vadd.f32 %v1005, %v1133
      %v1135 = vpop.f32.mrf.mxu0
      %1136 = vmatprep.mubr.f32.mxu0 0.0
      %1137 = vmatmul.mubr.f32.gmra.mxu0 %v981
      %v1138 = vpop.f32.mrf.mxu0
      %v1139 = vadd.f32 %v1005, %v1138
      %v1140 = vpop.f32.mrf.mxu0
      %1141 = vmatprep.mubr.f32.mxu0 0.0
      %1142 = vmatmul.mubr.f32.gmra.mxu0 %v982
      %v1143 = vpop.f32.mrf.mxu0
      %v1144 = vadd.f32 %v1005, %v1143
      %v1145 = vpop.f32.mrf.mxu0
      %1146 = vmatprep.mubr.f32.mxu0 0.0
      %1147 = vmatmul.mubr.f32.gmra.mxu0 %v983
      %v1148 = vpop.f32.mrf.mxu0
      %v1149 = vadd.f32 %v1005, %v1148
      %v1150 = vpop.f32.mrf.mxu0
      %1151 = vdwg.mxu0
      %v1152 = vtanh.pop %v309
      %v1153 = vtanh.pop %v310
      %v1154 = vtanh.pop %v311
      %v1155 = vtanh.pop %v312
      %v1156 = vtanh.pop %v313
      %v1157 = vtanh.pop %v314
      %v1158 = vtanh.pop %v315
      %v1159 = vtanh.pop %v316
      %v1160 = vtanh.pop %v317
      %v1161 = vtanh.pop %v318
      %v1162 = vtanh.pop %v319
      %v1163 = vtanh.pop %v320
      %v1164 = vtanh.pop %v321
      %v1165 = vtanh.pop %v322
      %v1166 = vtanh.pop %v323
      %v1167 = vtanh.pop %v324
      %v1168 = vlaneseq
      %v1169 = vand.u32 %v1168, 127
      %vm1170 = vcmp.lt.s32.totalorder %v1169, 3
      %v1171 = vsel %vm1170, 1, 0
      %vm1172 = vcmp.eq.s32.totalorder %v1171, 1
      %1174 = vset.pattern.permute.xlu0 54
      %1175 = vperm.xlu0 %1174, %v1152
      %v1176 = vpop.permute.xlu0 %1175
      %1179 = vset.pattern.permute.xlu0 54
      %1180 = vperm.xlu0 %1179, %v1153
      %v1181 = vpop.permute.xlu0 %1180
      %1184 = vset.pattern.permute.xlu0 54
      %1185 = vperm.xlu0 %1184, %v1154
      %v1186 = vpop.permute.xlu0 %1185
      %1189 = vset.pattern.permute.xlu0 54
      %1190 = vperm.xlu0 %1189, %v1155
      %v1191 = vpop.permute.xlu0 %1190
      %1194 = vset.pattern.permute.xlu0 54
      %1195 = vperm.xlu0 %1194, %v1156
      %v1196 = vpop.permute.xlu0 %1195
      %1199 = vset.pattern.permute.xlu0 54
      %1200 = vperm.xlu0 %1199, %v1157
      %v1201 = vpop.permute.xlu0 %1200
      %1204 = vset.pattern.permute.xlu0 54
      %1205 = vperm.xlu0 %1204, %v1158
      %v1206 = vpop.permute.xlu0 %1205
      %1209 = vset.pattern.permute.xlu0 54
      %1210 = vperm.xlu0 %1209, %v1159
      %v1211 = vpop.permute.xlu0 %1210
      %1214 = vset.pattern.permute.xlu0 54
      %1215 = vperm.xlu0 %1214, %v1160
      %v1216 = vpop.permute.xlu0 %1215
      %1219 = vset.pattern.permute.xlu0 54
      %1220 = vperm.xlu0 %1219, %v1161
      %v1221 = vpop.permute.xlu0 %1220
      %1224 = vset.pattern.permute.xlu0 54
      %1225 = vperm.xlu0 %1224, %v1162
      %v1226 = vpop.permute.xlu0 %1225
      %1229 = vset.pattern.permute.xlu0 54
      %1230 = vperm.xlu0 %1229, %v1163
      %v1231 = vpop.permute.xlu0 %1230
      %1234 = vset.pattern.permute.xlu0 54
      %1235 = vperm.xlu0 %1234, %v1164
      %v1236 = vpop.permute.xlu0 %1235
      %1239 = vset.pattern.permute.xlu0 54
      %1240 = vperm.xlu0 %1239, %v1165
      %v1241 = vpop.permute.xlu0 %1240
      %1244 = vset.pattern.permute.xlu0 54
      %1245 = vperm.xlu0 %1244, %v1166
      %v1246 = vpop.permute.xlu0 %1245
      %1249 = vset.pattern.permute.xlu0 54
      %1250 = vperm.xlu0 %1249, %v1167
      %v1251 = vpop.permute.xlu0 %1250
      %1253 = vset.pattern.permute.xlu0 55
      %1254 = vperm.xlu0 %1253, %v1152
      %v1255 = vpop.permute.xlu0 %1254
      %1257 = vset.pattern.permute.xlu0 55
      %1258 = vperm.xlu0 %1257, %v1153
      %v1259 = vpop.permute.xlu0 %1258
      %1261 = vset.pattern.permute.xlu0 55
      %1262 = vperm.xlu0 %1261, %v1154
      %v1263 = vpop.permute.xlu0 %1262
      %1265 = vset.pattern.permute.xlu0 55
      %1266 = vperm.xlu0 %1265, %v1155
      %v1267 = vpop.permute.xlu0 %1266
      %1269 = vset.pattern.permute.xlu0 55
      %1270 = vperm.xlu0 %1269, %v1156
      %v1271 = vpop.permute.xlu0 %1270
      %1273 = vset.pattern.permute.xlu0 55
      %1274 = vperm.xlu0 %1273, %v1157
      %v1275 = vpop.permute.xlu0 %1274
      %1277 = vset.pattern.permute.xlu0 55
      %1278 = vperm.xlu0 %1277, %v1158
      %v1279 = vpop.permute.xlu0 %1278
      %1281 = vset.pattern.permute.xlu0 55
      %1282 = vperm.xlu0 %1281, %v1159
      %v1283 = vpop.permute.xlu0 %1282
      %1285 = vset.pattern.permute.xlu0 55
      %1286 = vperm.xlu0 %1285, %v1160
      %v1287 = vpop.permute.xlu0 %1286
      %1289 = vset.pattern.permute.xlu0 55
      %1290 = vperm.xlu0 %1289, %v1161
      %v1291 = vpop.permute.xlu0 %1290
      %1293 = vset.pattern.permute.xlu0 55
      %1294 = vperm.xlu0 %1293, %v1162
      %v1295 = vpop.permute.xlu0 %1294
      %1297 = vset.pattern.permute.xlu0 55
      %1298 = vperm.xlu0 %1297, %v1163
      %v1299 = vpop.permute.xlu0 %1298
      %1301 = vset.pattern.permute.xlu0 55
      %1302 = vperm.xlu0 %1301, %v1164
      %v1303 = vpop.permute.xlu0 %1302
      %1305 = vset.pattern.permute.xlu0 55
      %1306 = vperm.xlu0 %1305, %v1165
      %v1307 = vpop.permute.xlu0 %1306
      %1309 = vset.pattern.permute.xlu0 55
      %1310 = vperm.xlu0 %1309, %v1166
      %v1311 = vpop.permute.xlu0 %1310
      %1313 = vset.pattern.permute.xlu0 55
      %1314 = vperm.xlu0 %1313, %v1167
      %v1315 = vpop.permute.xlu0 %1314
      %v1317 = vsel %vm1172, %v1176, %v1255
      %v1318 = vsel %vm1172, %v1181, %v1259
      %v1319 = vsel %vm1172, %v1186, %v1263
      %v1320 = vsel %vm1172, %v1191, %v1267
      %v1321 = vsel %vm1172, %v1196, %v1271
      %v1322 = vsel %vm1172, %v1201, %v1275
      %v1323 = vsel %vm1172, %v1206, %v1279
      %v1324 = vsel %vm1172, %v1211, %v1283
      %v1325 = vsel %vm1172, %v1216, %v1287
      %v1326 = vsel %vm1172, %v1221, %v1291
      %v1327 = vsel %vm1172, %v1226, %v1295
      %v1328 = vsel %vm1172, %v1231, %v1299
      %v1329 = vsel %vm1172, %v1236, %v1303
      %v1330 = vsel %vm1172, %v1241, %v1307
      %v1331 = vsel %vm1172, %v1246, %v1311
      %v1332 = vsel %vm1172, %v1251, %v1315
      %v1333 = vmul.f32 %v1074, %v1317
      %v1334 = vmul.f32 %v1079, %v1318
      %v1335 = vmul.f32 %v1084, %v1319
      %v1336 = vmul.f32 %v1089, %v1320
      %v1337 = vmul.f32 %v1094, %v1321
      %v1338 = vmul.f32 %v1099, %v1322
      %v1339 = vmul.f32 %v1104, %v1323
      %v1340 = vmul.f32 %v1109, %v1324
      %v1341 = vmul.f32 %v1114, %v1325
      %v1342 = vmul.f32 %v1119, %v1326
      %v1343 = vmul.f32 %v1124, %v1327
      %v1344 = vmul.f32 %v1129, %v1328
      %v1345 = vmul.f32 %v1134, %v1329
      %v1346 = vmul.f32 %v1139, %v1330
      %v1347 = vmul.f32 %v1144, %v1331
      %v1348 = vmul.f32 %v1149, %v1332
      %v1349 = vadd.f32 %v309, %v1333
      %v1350 = vadd.f32 %v310, %v1334
      %v1351 = vadd.f32 %v311, %v1335
      %v1352 = vadd.f32 %v312, %v1336
      %v1353 = vadd.f32 %v313, %v1337
      %v1354 = vadd.f32 %v314, %v1338
      %v1355 = vadd.f32 %v315, %v1339
      %v1356 = vadd.f32 %v316, %v1340
      %v1357 = vadd.f32 %v317, %v1341
      %v1358 = vadd.f32 %v318, %v1342
      %v1359 = vadd.f32 %v319, %v1343
      %v1360 = vadd.f32 %v320, %v1344
      %v1361 = vadd.f32 %v321, %v1345
      %v1362 = vadd.f32 %v322, %v1346
      %v1363 = vadd.f32 %v323, %v1347
      %v1364 = vadd.f32 %v324, %v1348
      %1365 = vst.msk [vmem:[%s307] sm:$0xff] %vm333, %v1349
      %1366 = vst.msk [vmem:[%s307 + $0x8] sm:$0xff] %vm333, %v1350
      %1367 = vst.msk [vmem:[%s307 + $0x10] sm:$0xff] %vm333, %v1351
      %1368 = vst.msk [vmem:[%s307 + $0x18] sm:$0xff] %vm333, %v1352
      %1369 = vst.msk [vmem:[%s307 + $0x20] sm:$0xff] %vm333, %v1353
      %1370 = vst.msk [vmem:[%s307 + $0x28] sm:$0xff] %vm333, %v1354
      %1371 = vst.msk [vmem:[%s307 + $0x30] sm:$0xff] %vm333, %v1355
      %1372 = vst.msk [vmem:[%s307 + $0x38] sm:$0xff] %vm333, %v1356
      %1373 = vst.msk [vmem:[%s307 + $0x40] sm:$0xff] %vm333, %v1357
      %1374 = vst.msk [vmem:[%s307 + $0x48] sm:$0xff] %vm333, %v1358
      %1375 = vst.msk [vmem:[%s307 + $0x50] sm:$0xff] %vm333, %v1359
      %1376 = vst.msk [vmem:[%s307 + $0x58] sm:$0xff] %vm333, %v1360
      %1377 = vst.msk [vmem:[%s307 + $0x60] sm:$0xff] %vm333, %v1361
      %1378 = vst.msk [vmem:[%s307 + $0x68] sm:$0xff] %vm333, %v1362
      %1379 = vst.msk [vmem:[%s307 + $0x70] sm:$0xff] %vm333, %v1363
      %1380 = vst.msk [vmem:[%s307 + $0x78] sm:$0xff] %vm333, %v1364
      %s1381 = smul.u32 16, %s19
      %p1382 = scmp.lt.s32.totalorder %s1381, 31
      %s1383 = scalar_select %p1382, %s1381, 31
      %s1384 = smul.addr %s1383, 8
      %s1385 = scalar_lea.vmem %s8, %s1384
      // Predicated region
      $region53: #{deform_network_anchor_forward.1} parent=51 // pred_check
        %p1386 = pneg %p210
      $region54: #{deform_network_anchor_forward.1} parent=51 // pred_check_branch
        %1388 = sbr.rel (%p1386) target = $region56
      $region55: #{deform_network_anchor_forward.1} parent=51 // pred_region
        %s1389 = smul.u32 16, %s19
      $region56: #{deform_network_anchor_forward.1} parent=51 // pred_fallthru
        _
    $region52: #{deform_network_anchor_forward.1} parent=5 // pred_fallthru
      _
    %p1390 = scmp.le.s32.totalorder 2, %s14
    // Predicated region
    $region57: #{deform_network_anchor_forward.1} parent=5 // pred_check
      %p1391 = pneg %p1390
    $region58: #{deform_network_anchor_forward.1} parent=5 // pred_check_branch
      %1393 = sbr.rel (%p1391) target = $region60
    $region59: #{deform_network_anchor_forward.1} parent=5 // pred_region
      %s1394 = ssub.s32 %s14, 2
      // Predicated region
      $region61: #{deform_network_anchor_forward.1} parent=59 // pred_check
        %p1395 = pneg %p216
      $region62: #{deform_network_anchor_forward.1} parent=59 // pred_check_branch
        %1397 = sbr.rel (%p1395) target = $region64
      $region63: #{deform_network_anchor_forward.1} parent=59 // pred_region
        %s1398 = smul.u32 16, %s20
        %p1399 = scmp.lt.s32.totalorder %s1398, 31
        %s1400 = scalar_select %p1399, %s1398, 31
        %s1401 = smul.addr %s1400, 8
        %s1402 = scalar_lea.vmem %s8, %s1401
      $region64: #{deform_network_anchor_forward.1} parent=59 // pred_fallthru
        _
    $region60: #{deform_network_anchor_forward.1} parent=5 // pred_fallthru
      _
  $region6: #{deform_network_anchor_forward.1} parent=0 // loop_footer
    %s18 = sadd.s32 1, %s14
  $region7: #{deform_network_anchor_forward.1} parent=0 // loop_footer_branch
    %13 = sbr.rel target = $region3
  $region8: #{deform_network_anchor_forward.1} parent=0 // loop_exit
    _

</llo_original>
